<compile_context>
chip_gen: v7x
topology: tpu7x:2x2x1
jax: 0.10.0
libtpu: 0.0.40
codegen_flags: <defaults>
</compile_context>

<pallas_src>
import jax
import jax.numpy as jnp
from jax.experimental import pallas as pl
from jax.experimental.pallas import tpu as pltpu

DEFAULT_TM = 512  # rows (phrases) per grid step; 512*1024*4B*2buf*2arrays ~ 8 MiB


def _phrase_type_kernel(ids_ref, x_ref, tab_ref, o_ref):
    # ids_ref : VMEM [TM, 1]  int32 type ids for this row tile
    # x_ref   : VMEM [TM, H]  phrase embeddings tile
    # tab_ref : VMEM [T,  H]  full type-embedding table (resident, tiny)
    # o_ref   : VMEM [TM, H]
    tm = x_ref.shape[0]
    t = tab_ref.shape[0]

    ids = ids_ref[...]                                              # [TM, 1]
    type_iota = jax.lax.broadcasted_iota(jnp.int32, (tm, t), 1)     # [TM, T]
    one_hot = (ids == type_iota).astype(jnp.float32)                # [TM, T]

    gathered = jnp.dot(one_hot, tab_ref[...].astype(jnp.float32),
                       preferred_element_type=jnp.float32)          # [TM, H]

    o_ref[...] = (x_ref[...].astype(jnp.float32) + gathered).astype(o_ref.dtype)


def phrase_type_encoder_forward(batch_phrase_emb, phrase_type_ids, table, *, tm=DEFAULT_TM):
    """out = batch_phrase_emb + table[phrase_type_ids] (vectorised gather + add)."""
    B, N, H = batch_phrase_emb.shape
    T = table.shape[0]
    rows = B * N

    x = batch_phrase_emb.reshape(rows, H)
    ids = phrase_type_ids.reshape(rows, 1).astype(jnp.int32)

    # Don't allocate a tile far bigger than the problem; keep sublane multiple of 8.
    tm = min(tm, ((rows + 7) // 8) * 8)
    grid = (pl.cdiv(rows, tm),)

    dsize = jnp.dtype(batch_phrase_emb.dtype).itemsize
    cost = pl.CostEstimate(
        flops=2 * rows * T * H + rows * H,          # one-hot dot + add
        transcendentals=0,
        bytes_accessed=2 * rows * H * dsize + T * H * dsize + rows * 4,
    )

    out = pl.pallas_call(
        _phrase_type_kernel,
        out_shape=jax.ShapeDtypeStruct((rows, H), batch_phrase_emb.dtype),
        grid=grid,
        in_specs=[
            pl.BlockSpec((tm, 1), lambda i: (i, 0)),   # type ids tile
            pl.BlockSpec((tm, H), lambda i: (i, 0)),   # phrase embedding tile
            pl.BlockSpec((T, H), lambda i: (0, 0)),    # full table, resident
        ],
        out_specs=pl.BlockSpec((tm, H), lambda i: (i, 0)),
        compiler_params=pltpu.CompilerParams(
            dimension_semantics=("parallel",)),        # independent row tiles (v7x 2-TC)
        cost_estimate=cost,
    )(ids, x, table)

    return out.reshape(B, N, H)


def make_phrase_attribute_table(key, num_types, hidden_size, dtype=jnp.float32):
    """Synthetic stand-in for phrase_attribute_emb_all:
    num_types BERT-CLS-like rows + one zero 'other' row (as in __init__)."""
    # TODO(synk): the real module derives these rows from a BERT encoder over
    # the phrase_attribute.json type texts (host-side setup, not a kernel op).
    emb = jax.random.normal(key, (num_types, hidden_size), dtype=dtype)
    other = jnp.zeros((1, hidden_size), dtype=dtype)
    return jnp.concatenate([emb, other], axis=0)  # [num_types + 1, H]


if __name__ == "__main__":
    key = jax.random.PRNGKey(0)
    k_tab, k_x, k_ids, k_x2, k_ids2 = jax.random.split(key, 5)

    B, N, H = 2, 8, 128          # batch, phrases per example, hidden size
    NUM_TYPES = 4                # -> table has 5 rows (incl. zero "other" row)

    table = make_phrase_attribute_table(k_tab, NUM_TYPES, H)
    batch_phrase_emb = jax.random.normal(k_x, (B, N, H), dtype=jnp.float32)
    phrase_type_ids = jax.random.randint(k_ids, (B, N), 0, NUM_TYPES + 1)

    out = phrase_type_encoder_forward(batch_phrase_emb, phrase_type_ids, table)
    out = jax.block_until_ready(out)

    ref = batch_phrase_emb + table[phrase_type_ids]
    assert out.shape == (B, N, H)
    assert jnp.allclose(out, ref, atol=1e-6, rtol=1e-6)

    # Row count not divisible by the tile -> exercises the partial tail block
    # (no host-side pad of x, no output slice).
    B2, N2 = 3, 5
    x2 = jax.random.normal(k_x2, (B2, N2, H), dtype=jnp.float32)
    ids2 = jax.random.randint(k_ids2, (B2, N2), 0, NUM_TYPES + 1)
    out2 = jax.block_until_ready(phrase_type_encoder_forward(x2, ids2, table))
    ref2 = x2 + table[ids2]
    assert jnp.allclose(out2, ref2, atol=1e-6, rtol=1e-6)

    print("KERNEL_OK")
</pallas_src>

<mosaic_0001>
module attributes {stable_mosaic.version = 11 : i64} {
  func.func @_phrase_type_kernel(%arg0: i32, %arg1: memref<16x1xi32, #tpu.memory_space<vmem>>, %arg2: memref<16x128xf32, #tpu.memory_space<vmem>>, %arg3: memref<5x128xf32, #tpu.memory_space<vmem>>, %arg4: memref<16x128xf32, #tpu.memory_space<vmem>>) attributes {dimension_semantics = [#tpu.dimension_semantics<parallel>], iteration_bounds = array<i64: 1>, scalar_prefetch = 0 : i64, scratch_operands = 0 : i64, tpu.core_type = #tpu.core_type<tc>, window_params = [{transform_indices = @transform_0, window_bounds = array<i64: 16, 1>}, {transform_indices = @transform_1, window_bounds = array<i64: 16, 128>}, {pipeline_mode = #tpu.pipeline_mode<synchronous>, transform_indices = @transform_2, window_bounds = array<i64: 5, 128>}, {transform_indices = @transform_3, window_bounds = array<i64: 16, 128>}]} {
    %c0 = arith.constant 0 : index
    %c0_0 = arith.constant 0 : index
    %0 = vector.load %arg1[%c0, %c0_0] : memref<16x1xi32, #tpu.memory_space<vmem>>, vector<16x1xi32>
    %1 = tpu.iota {dimensions = array<i32: 1>} : vector<16x5xi32>
    %2 = vector.broadcast %0 : vector<16x1xi32> to vector<16x5xi32>
    %3 = arith.cmpi eq, %2, %1 : vector<16x5xi32>
    %4 = arith.extui %3 : vector<16x5xi1> to vector<16x5xi32>
    %5 = arith.sitofp %4 : vector<16x5xi32> to vector<16x5xf32>
    %c0_1 = arith.constant 0 : index
    %c0_2 = arith.constant 0 : index
    %6 = vector.load %arg3[%c0_1, %c0_2] : memref<5x128xf32, #tpu.memory_space<vmem>>, vector<5x128xf32>
    %cst = arith.constant dense<0.000000e+00> : vector<16x128xf32>
    %7 = tpu.matmul %5, %6, %cst {dimension_numbers = #tpu.dot_dimension_numbers<[1], [0], [0], [1], [0, 0, 1, 1], [], []>} : vector<16x5xf32>, vector<5x128xf32>, vector<16x128xf32> -> vector<16x128xf32>
    %c0_3 = arith.constant 0 : index
    %c0_4 = arith.constant 0 : index
    %8 = vector.load %arg2[%c0_3, %c0_4] : memref<16x128xf32, #tpu.memory_space<vmem>>, vector<16x128xf32>
    %9 = arith.addf %8, %7 : vector<16x128xf32>
    %c0_5 = arith.constant 0 : index
    %c0_6 = arith.constant 0 : index
    %10 = vector.load %arg4[%c0_5, %c0_6] : memref<16x128xf32, #tpu.memory_space<vmem>>, vector<16x128xf32>
    tpu.vector_store %arg4[%c0_5, %c0_6], %9 {strides = array<i32>} : memref<16x128xf32, #tpu.memory_space<vmem>>, vector<16x128xf32>,
    return
  }
  func.func @transform_0(%arg0: i32) -> (i32, i32) {
    %c0_i32 = arith.constant 0 : i32
    %c0_i32_0 = arith.constant 0 : i32
    return %arg0, %c0_i32 : i32, i32
  }
  func.func @transform_1(%arg0: i32) -> (i32, i32) {
    %c0_i32 = arith.constant 0 : i32
    %c0_i32_0 = arith.constant 0 : i32
    return %arg0, %c0_i32 : i32, i32
  }
  func.func @transform_2(%arg0: i32) -> (i32, i32) {
    %c0_i32 = arith.constant 0 : i32
    %c0_i32_0 = arith.constant 0 : i32
    %c0_i32_1 = arith.constant 0 : i32
    return %c0_i32, %c0_i32_0 : i32, i32
  }
  func.func @transform_3(%arg0: i32) -> (i32, i32) {
    %c0_i32 = arith.constant 0 : i32
    %c0_i32_0 = arith.constant 0 : i32
    return %arg0, %c0_i32 : i32, i32
  }
}

</mosaic_0001>

<llo_original>
// kernel: tpu_custom_call.1
$region0: #{tpu_custom_call.1}
  #allocation0 [shape = 'u32[]', space=smem, size = 0x4, offset = 0x4, fixed_abs, tag = 'smem constant byte address 0x4 - core index']
  #allocation1 [shape = 'u32[144,128]{1,0:T(1,128)}', space=vmem, size = 0x12000, scoped, tag = 'internal scratch']
  %s0 = inlined_call_operand.vmem [shape: s32[16,1], index: 0, kind: input, shape index: {}]
  %s1 = inlined_call_operand.vmem [shape: f32[16,128], index: 1, kind: input, shape index: {}]
  %s2 = inlined_call_operand.vmem [shape: f32[5,128], index: 2, kind: input, shape index: {}]
  %s3 = inlined_call_operand.hbm [shape: f32[16,128], index: 3, kind: output, shape index: {}]
  %s4 = sld [smem:[#allocation0]]
  $region22: #{tpu_custom_call.1} parent=0
    _
  %s6 = ssub.s32 1, %s4
  %s7 = scalar_select 0, %s6, %s4
  $region1: #{tpu_custom_call.1} parent=0
    #allocation2 [shape = 'u8[8192]{0}', space=vmem, size = 0x2000, scoped, tag = 'output window, operand 0, single buffered']
    #allocation3 [shape = 's32[1]{0}', space=sflag, size = 0x4, scoped, tag = 'scoped memory for tpu_custom_call.1']
    %8 = vsyncpa [#allocation3], 0
    // Predicated region
    $region2: #{tpu_custom_call.1} parent=1 // pred_check
      _
    $region3: #{tpu_custom_call.1} parent=1 // pred_check_branch
      %10 = sbr.rel (0) target = $region5
    $region4: #{tpu_custom_call.1} parent=1 // pred_region
      _
    $region5: #{tpu_custom_call.1} parent=1 // pred_fallthru
      _
    // Predicated region
    $region6: #{tpu_custom_call.1} parent=1 // pred_check
      _
    $region7: #{tpu_custom_call.1} parent=1 // pred_check_branch
      %12 = sbr.rel (0) target = $region9
    $region8: #{tpu_custom_call.1} parent=1 // pred_region
      _
    $region9: #{tpu_custom_call.1} parent=1 // pred_fallthru
      _
    // Predicated region
    $region10: #{tpu_custom_call.1} parent=1 // pred_check
      _
    $region11: #{tpu_custom_call.1} parent=1 // pred_check_branch
      %14 = sbr.rel (0) target = $region13
    $region12: #{tpu_custom_call.1} parent=1 // pred_region
      _
    $region13: #{tpu_custom_call.1} parent=1 // pred_fallthru
      _
    %v15 = vld [vmem:[%s0] sm:$0xff]
    %v16 = vld [vmem:[%s0 + $0x8] sm:$0xff]
    %v17 = vlaneseq
    %v18 = vand.u32 %v17, 127
    %19 = vset.pattern.permute.xlu0 0
    %20 = vperm.xlu0 %19, %v15
    %v21 = vpop.permute.xlu0 %20
    %22 = vset.pattern.permute.xlu0 0
    %23 = vperm.xlu0 %22, %v16
    %v24 = vpop.permute.xlu0 %23
    %vm25 = vcmp.eq.s32.totalorder %v21, %v18
    %vm26 = vcmp.eq.s32.totalorder %v24, %v18
    %v27 = vsel %vm25, 1, 0
    %v28 = vsel %vm26, 1, 0
    %v29 = vcvt.s32.f32 %v27
    %v30 = vcvt.s32.f32 %v28
    %v31 = vld [vmem:[%s2] sm:$0x1f]
    %vm32 = vcmask 39936
    %v34 = vsel %vm32, %v29, 0
    %v37 = vsel %vm32, %v30, 0
    %vm39 = vcmask 1044480
    %v41 = vsel %vm39, %v31, 0
    %43 = vmatprep.subr.mxu0 0.0
    %44 = vmatpush1.msra.mxu0 %v41
    %45 = vmatprep.subr.mxu0 0.0
    %46 = vmatpush1.msra.mxu0 0.0
    %47 = vmatprep.subr.mxu0 0.0
    %48 = vmatpush1.msra.mxu0 0.0
    %49 = vmatprep.subr.mxu0 0.0
    %50 = vmatpush1.msra.mxu0 0.0
    %51 = vmatprep.subr.mxu0 0.0
    %52 = vmatpush1.msra.mxu0 0.0
    %53 = vmatprep.subr.mxu0 0.0
    %54 = vmatpush1.msra.mxu0 0.0
    %55 = vmatprep.subr.mxu0 0.0
    %56 = vmatpush1.msra.mxu0 0.0
    %57 = vmatprep.subr.mxu0 0.0
    %58 = vmatpush1.msra.mxu0 0.0
    %59 = vmatprep.subr.mxu0 0.0
    %60 = vmatpush1.msra.mxu0 0.0
    %61 = vmatprep.subr.mxu0 0.0
    %62 = vmatpush1.msra.mxu0 0.0
    %63 = vmatprep.subr.mxu0 0.0
    %64 = vmatpush1.msra.mxu0 0.0
    %65 = vmatprep.subr.mxu0 0.0
    %66 = vmatpush1.msra.mxu0 0.0
    %67 = vmatprep.subr.mxu0 0.0
    %68 = vmatpush1.msra.mxu0 0.0
    %69 = vmatprep.subr.mxu0 0.0
    %70 = vmatpush1.msra.mxu0 0.0
    %71 = vmatprep.subr.mxu0 0.0
    %72 = vmatpush1.msra.mxu0 0.0
    %73 = vmatprep.subr.mxu0 0.0
    %74 = vmatpush1.msra.mxu0 0.0
    %75 = vmatprep.subr.mxu0 0.0
    %76 = vmatpush1.msra.mxu0 0.0
    %77 = vmatprep.subr.mxu0 0.0
    %78 = vmatpush1.msra.mxu0 0.0
    %79 = vmatprep.subr.mxu0 0.0
    %80 = vmatpush1.msra.mxu0 0.0
    %81 = vmatprep.subr.mxu0 0.0
    %82 = vmatpush1.msra.mxu0 0.0
    %83 = vmatprep.subr.mxu0 0.0
    %84 = vmatpush1.msra.mxu0 0.0
    %85 = vmatprep.subr.mxu0 0.0
    %86 = vmatpush1.msra.mxu0 0.0
    %87 = vmatprep.subr.mxu0 0.0
    %88 = vmatpush1.msra.mxu0 0.0
    %89 = vmatprep.subr.mxu0 0.0
    %90 = vmatpush1.msra.mxu0 0.0
    %91 = vmatprep.subr.mxu0 0.0
    %92 = vmatpush1.msra.mxu0 0.0
    %93 = vmatprep.subr.mxu0 0.0
    %94 = vmatpush1.msra.mxu0 0.0
    %95 = vmatprep.subr.mxu0 0.0
    %96 = vmatpush1.msra.mxu0 0.0
    %97 = vmatprep.subr.mxu0 0.0
    %98 = vmatpush1.msra.mxu0 0.0
    %99 = vmatprep.subr.mxu0 0.0
    %100 = vmatpush1.msra.mxu0 0.0
    %101 = vmatprep.subr.mxu0 0.0
    %102 = vmatpush1.msra.mxu0 0.0
    %103 = vmatprep.subr.mxu0 0.0
    %104 = vmatpush1.msra.mxu0 0.0
    %105 = vmatprep.subr.mxu0 0.0
    %106 = vmatpush1.msra.mxu0 0.0
    %107 = vmatprep.mubr.f32.mxu0 0.0
    %108 = vmatmul.mubr.f32.gmra.mrb[0].mxu0 %v34
    %v109 = vpop.f32.mrb[0].mxu0
    %v110 = vadd.f32 0.0, %v109
    %v111 = vpop.f32.mrb[0].mxu0
    %112 = vmatprep.mubr.f32.mxu0 0.0
    %113 = vmatmul.mubr.f32.gmra.mrb[0].mxu0 %v37
    %v114 = vpop.f32.mrb[0].mxu0
    %v115 = vadd.f32 0.0, %v114
    %v116 = vpop.f32.mrb[0].mxu0
    %117 = vdwg.mxu0
    %v118 = vld [vmem:[%s1] sm:$0xff]
    %v119 = vld [vmem:[%s1 + $0x8] sm:$0xff]
    %v120 = vadd.f32 %v118, %v110
    %v121 = vadd.f32 %v119, %v115
    %122 = vst [vmem:[#allocation2] sm:$0xff] %v120
    %123 = vst [vmem:[#allocation2 + $0x8] sm:$0xff] %v121
    // Predicated region
    $region14: #{tpu_custom_call.1} parent=1 // pred_check
      _
    $region15: #{tpu_custom_call.1} parent=1 // pred_check_branch
      %125 = sbr.rel (0) target = $region17
    $region16: #{tpu_custom_call.1} parent=1 // pred_region
      %s127 = ssub.s32 256, 256
      %128 = vsyncadd [#allocation3], %s127
      %s129 = sshll.u32 [#allocation2], 4
      %s130 = int_to_ptr.vmem [resolvable:$true] %s129
      %135 = dma.vmem_to_hbm [thread:$0]  %s130, 256, %s3, [#allocation3], 128, 128, 8
    $region17: #{tpu_custom_call.1} parent=1 // pred_fallthru
      _
    // Predicated region
    $region18: #{tpu_custom_call.1} parent=1 // pred_check
      _
    $region19: #{tpu_custom_call.1} parent=1 // pred_check_branch
      %137 = sbr.rel (0) target = $region21
    $region20: #{tpu_custom_call.1} parent=1 // pred_region
      %138 = dma.done [#allocation3], 256
    $region21: #{tpu_custom_call.1} parent=1 // pred_fallthru
      _
    %139 = vsyncpa [#allocation3], 1

</llo_original>
